<compile_context>
chip_gen: v7x
topology: tpu7x:2x2x1
jax: 0.10.0
libtpu: 0.0.40
codegen_flags: <defaults>
</compile_context>

<pallas_src>
import functools

import jax
import jax.numpy as jnp
from jax.experimental import pallas as pl
from jax.experimental.pallas import tpu as pltpu

LN_EPS = 1e-5


def _round_up(x, m):
    return ((x + m - 1) // m) * m


@functools.lru_cache(maxsize=1)
def _vmem_budgets():
    """(tile_vmem_budget, vmem_limit_bytes) for the current TPU generation."""
    try:
        cap = pltpu.get_tpu_info().vmem_capacity_bytes
    except Exception:  # not on TPU / info unavailable: assume the small case
        cap = 64 << 20
    if cap >= (100 << 20):          # v5e / v6e: 128 MiB physical VMEM
        return 64 << 20, 96 << 20
    return 28 << 20, 48 << 20       # v7x: 64 MiB per TensorCore


@functools.lru_cache(maxsize=1)
def _has_bf16_vpu():
    """v6e/v7x have native bf16 VALU/EUP; v5e does not."""
    try:
        kind = jax.devices()[0].device_kind.lower()
    except Exception:
        return True
    return not ("v5 lite" in kind or "v5lite" in kind or "v5e" in kind)


def _layernorm_kernel(x_ref, w_ref, b_ref, o_ref, *, h_valid, compute_dtype):
    # x_ref: (block_rows, Hp), w_ref/b_ref: (1, Hp).  Hp >= h_valid (lane pad).
    x = x_ref[...]
    hp = x.shape[-1]
    x32 = x.astype(jnp.float32)

    masked = h_valid != hp
    if masked:
        lane_valid = (
            jax.lax.broadcasted_iota(jnp.int32, (1, hp), 1) < h_valid
        )
        x32 = jnp.where(lane_valid, x32, 0.0)

    inv_h = jnp.float32(1.0 / h_valid)
    mean = jnp.sum(x32, axis=-1, keepdims=True) * inv_h        # f32 stats
    diff = x32 - mean
    if masked:
        diff = jnp.where(lane_valid, diff, 0.0)
    var = jnp.sum(diff * diff, axis=-1, keepdims=True) * inv_h  # two-pass var
    inv = jax.lax.rsqrt(var + LN_EPS)                           # EUP rsqrt

    w = w_ref[...]   # already in compute dtype (cast once in wrapper)
    b = b_ref[...]
    if compute_dtype == jnp.float32:
        y = diff * inv * w + b
    else:
        # bf16 elementwise pass (v6e/v7x): stats stay f32, per-element math
        # in bf16 halves vreg pressure and VALU bytes.
        y = ((x.astype(compute_dtype) - mean.astype(compute_dtype))
             * inv.astype(compute_dtype)) * w + b
    o_ref[...] = y.astype(o_ref.dtype)


def _pick_block_rows(R, Hp, itemsize, tile_budget):
    """Largest sublane-aligned row tile that fits the VMEM tile budget,
    shaped so the grid pipelines (>=4 steps when possible) and stays
    even-length for v7x megacore balance."""
    # Sublane pack factor: 8 rows/vreg for 4-byte, 16 for 2-byte, 32 for 1-byte.
    sublane = max(8, 32 // max(1, itemsize))
    # Per-row VMEM: double-buffered input + output tiles (4 * itemsize) plus
    # ~4 f32-wide materialized intermediates (x upcast, diff, products).
    per_row = Hp * (4 * itemsize + 16)
    block_rows = max(sublane, tile_budget // per_row)
    block_rows = (block_rows // sublane) * sublane

    r_ceil = _round_up(R, sublane)
    block_rows = min(block_rows, r_ceil, 2048)

    # Aim for at least ~4 grid steps so DMA and compute overlap.
    if r_ceil >= 4 * sublane:
        block_rows = min(block_rows, _round_up(-(-r_ceil // 4), sublane))
    block_rows = max(block_rows, sublane)

    # Nudge short odd grids to an even step count (v7x two-TC balance).
    steps = -(-r_ceil // block_rows)
    if 1 < steps <= 16 and steps % 2 == 1:
        cand = max(_round_up(-(-r_ceil // (steps + 1)), sublane), sublane)
        if (-(-r_ceil // cand)) % 2 == 0:
            block_rows = cand
    return block_rows


def layernorm_pallas(hidden, weight, bias, *, block_rows=None, donate_input=True):
    """LayerNorm over the last axis of `hidden` using a Pallas TPU kernel."""
    orig_shape = hidden.shape
    H = orig_shape[-1]
    x2d = hidden.reshape(-1, H)
    R = x2d.shape[0]
    itemsize = jnp.dtype(hidden.dtype).itemsize

    # Lane-dense output: pad H up to a multiple of 128 (stats masked in-kernel).
    Hp = max(_round_up(H, 128), 128)
    pad = Hp - H
    if pad:
        x2d = jnp.pad(x2d, ((0, 0), (0, pad)))

    # Elementwise pass dtype: bf16 on chips with bf16 VPU for bf16 inputs.
    compute_dtype = (jnp.bfloat16
                     if (hidden.dtype == jnp.bfloat16 and _has_bf16_vpu())
                     else jnp.float32)

    w1 = weight.astype(compute_dtype)
    b1 = bias.astype(compute_dtype)
    if pad:
        w1 = jnp.pad(w1, (0, pad), constant_values=1)
        b1 = jnp.pad(b1, (0, pad))
    w2d = w1.reshape(1, Hp)
    b2d = b1.reshape(1, Hp)

    tile_budget, vmem_limit = _vmem_budgets()
    if block_rows is None:
        block_rows = _pick_block_rows(R, Hp, itemsize, tile_budget)

    grid = (pl.cdiv(R, block_rows),)  # partial tail block masked by Pallas

    kernel = functools.partial(
        _layernorm_kernel, h_valid=H, compute_dtype=compute_dtype)

    out = pl.pallas_call(
        kernel,
        out_shape=jax.ShapeDtypeStruct((R, Hp), hidden.dtype),
        grid_spec=pltpu.PrefetchScalarGridSpec(
            num_scalar_prefetch=0,
            grid=grid,
            in_specs=[
                pl.BlockSpec((block_rows, Hp), lambda i: (i, 0)),
                # Constant (0,0) block index: fetched once, resident across grid.
                pl.BlockSpec((1, Hp), lambda i: (0, 0)),
                pl.BlockSpec((1, Hp), lambda i: (0, 0)),
            ],
            out_specs=pl.BlockSpec((block_rows, Hp), lambda i: (i, 0)),
        ),
        compiler_params=pltpu.CompilerParams(
            dimension_semantics=("parallel",),
            vmem_limit_bytes=vmem_limit,
        ),
        # hidden is dead after FinalNormPipe -> let the output reuse its buffer.
        input_output_aliases=({0: 0} if donate_input else {}),
    )(x2d, w2d, b2d)

    if pad:
        out = out[:, :H]
    return out.reshape(orig_shape)


def final_norm_pipe(inputs, weight, bias):
    """Forward pass of FinalNormPipe: (norm(hidden), attn, labels)."""
    hidden, attn, labels = inputs
    return (layernorm_pallas(hidden, weight, bias), attn, labels)


def _ref_layernorm(x, weight, bias):
    x = x.astype(jnp.float32)
    mean = jnp.mean(x, axis=-1, keepdims=True)
    var = jnp.mean((x - mean) ** 2, axis=-1, keepdims=True)
    return (x - mean) * jax.lax.rsqrt(var + LN_EPS) * weight + bias


if __name__ == "__main__":
    key = jax.random.PRNGKey(0)
    k_h, k_a, k_w, k_b, k_t = jax.random.split(key, 5)

    batch, seq, hidden_dim = 2, 8, 32

    hidden = jax.random.normal(k_h, (batch, seq, hidden_dim), dtype=jnp.float32)
    attn = jax.random.normal(k_a, (batch, 1, seq, seq), dtype=jnp.float32)
    labels = jnp.arange(batch * seq, dtype=jnp.int32).reshape(batch, seq)

    # Deterministic LayerNorm parameters (perturbed from the default 1/0 init
    # so the affine part is actually exercised).
    weight = 1.0 + 0.01 * jax.random.normal(k_w, (hidden_dim,), dtype=jnp.float32)
    bias = 0.01 * jax.random.normal(k_b, (hidden_dim,), dtype=jnp.float32)

    # Reference computed before the kernel call (the kernel may alias its input).
    ref = _ref_layernorm(hidden, weight, bias)

    out_hidden, out_attn, out_labels = final_norm_pipe(
        (hidden, attn, labels), weight, bias
    )
    jax.block_until_ready(out_hidden)
    jax.block_until_ready(out_attn)
    jax.block_until_ready(out_labels)

    assert jnp.allclose(out_hidden, ref, atol=1e-4, rtol=1e-5)
    assert jnp.array_equal(out_attn, attn)
    assert jnp.array_equal(out_labels, labels)

    # Exercise the masked-tail path: 15 rows, 8-row blocks, padded lanes.
    hidden_odd = jax.random.normal(k_t, (3, 5, hidden_dim), dtype=jnp.float32)
    ref_odd = _ref_layernorm(hidden_odd, weight, bias)
    out_odd = layernorm_pallas(hidden_odd, weight, bias, block_rows=8)
    jax.block_until_ready(out_odd)
    assert jnp.allclose(out_odd, ref_odd, atol=1e-4, rtol=1e-5)

    # Exercise the bf16 (reduced-precision elementwise) path.
    hidden_bf16 = hidden.astype(jnp.bfloat16)
    ref_bf16 = _ref_layernorm(hidden_bf16.astype(jnp.float32), weight, bias)
    out_bf16 = layernorm_pallas(hidden_bf16, weight, bias)
    jax.block_until_ready(out_bf16)
    assert jnp.allclose(out_bf16.astype(jnp.float32), ref_bf16,
                        atol=5e-2, rtol=5e-2)

    print("KERNEL_OK")
</pallas_src>

<mosaic_0001>
module attributes {stable_mosaic.version = 11 : i64} {
  func.func @_layernorm_kernel(%arg0: i32, %arg1: memref<16x128xf32, #tpu.memory_space<vmem>>, %arg2: memref<1x128xf32, #tpu.memory_space<vmem>>, %arg3: memref<1x128xf32, #tpu.memory_space<vmem>>, %arg4: memref<16x128xf32, #tpu.memory_space<vmem>>) attributes {dimension_semantics = [#tpu.dimension_semantics<parallel>], iteration_bounds = array<i64: 1>, scalar_prefetch = 0 : i64, scratch_operands = 0 : i64, tpu.core_type = #tpu.core_type<tc>, window_params = [{transform_indices = @transform_0, window_bounds = array<i64: 16, 128>}, {pipeline_mode = #tpu.pipeline_mode<synchronous>, transform_indices = @transform_1, window_bounds = array<i64: 1, 128>}, {pipeline_mode = #tpu.pipeline_mode<synchronous>, transform_indices = @transform_2, window_bounds = array<i64: 1, 128>}, {transform_indices = @transform_3, window_bounds = array<i64: 16, 128>}]} {
    %c0 = arith.constant 0 : index
    %c0_0 = arith.constant 0 : index
    %0 = vector.load %arg1[%c0, %c0_0] : memref<16x128xf32, #tpu.memory_space<vmem>>, vector<16x128xf32>
    %1 = tpu.iota {dimensions = array<i32: 1>} : vector<1x128xi32>
    %c32_i32 = arith.constant 32 : i32
    %2 = vector.broadcast %c32_i32 : i32 to vector<1x128xi32>
    %3 = arith.cmpi slt, %1, %2 : vector<1x128xi32>
    %cst = arith.constant 0.000000e+00 : f32
    %4 = vector.shape_cast %3 : vector<1x128xi1> to vector<1x128xi1>
    %5 = vector.broadcast %4 : vector<1x128xi1> to vector<16x128xi1>
    %6 = vector.broadcast %cst : f32 to vector<16x128xf32>
    %7 = arith.select %5, %0, %6 : vector<16x128xi1>, vector<16x128xf32>
    %cst_1 = arith.constant dense<0.000000e+00> : vector<16xf32>
    %8 = vector.multi_reduction <add>, %7, %cst_1 [1] : vector<16x128xf32> to vector<16xf32>
    %9 = vector.shape_cast %8 : vector<16xf32> to vector<16x1xf32>
    %cst_2 = arith.constant 3.125000e-02 : f32
    %10 = vector.broadcast %cst_2 : f32 to vector<16x1xf32>
    %11 = arith.mulf %9, %10 : vector<16x1xf32>
    %12 = vector.broadcast %11 : vector<16x1xf32> to vector<16x128xf32>
    %13 = arith.subf %7, %12 : vector<16x128xf32>
    %cst_3 = arith.constant 0.000000e+00 : f32
    %14 = vector.shape_cast %3 : vector<1x128xi1> to vector<1x128xi1>
    %15 = vector.broadcast %14 : vector<1x128xi1> to vector<16x128xi1>
    %16 = vector.broadcast %cst_3 : f32 to vector<16x128xf32>
    %17 = arith.select %15, %13, %16 : vector<16x128xi1>, vector<16x128xf32>
    %18 = arith.mulf %17, %17 : vector<16x128xf32>
    %cst_4 = arith.constant dense<0.000000e+00> : vector<16xf32>
    %19 = vector.multi_reduction <add>, %18, %cst_4 [1] : vector<16x128xf32> to vector<16xf32>
    %20 = vector.shape_cast %19 : vector<16xf32> to vector<16x1xf32>
    %cst_5 = arith.constant 3.125000e-02 : f32
    %21 = vector.broadcast %cst_5 : f32 to vector<16x1xf32>
    %22 = arith.mulf %20, %21 : vector<16x1xf32>
    %cst_6 = arith.constant 9.99999974E-6 : f32
    %23 = vector.broadcast %cst_6 : f32 to vector<16x1xf32>
    %24 = arith.addf %22, %23 : vector<16x1xf32>
    %25 = math.rsqrt %24 : vector<16x1xf32>
    %c0_7 = arith.constant 0 : index
    %c0_8 = arith.constant 0 : index
    %26 = vector.load %arg2[%c0_7, %c0_8] : memref<1x128xf32, #tpu.memory_space<vmem>>, vector<1x128xf32>
    %c0_9 = arith.constant 0 : index
    %c0_10 = arith.constant 0 : index
    %27 = vector.load %arg3[%c0_9, %c0_10] : memref<1x128xf32, #tpu.memory_space<vmem>>, vector<1x128xf32>
    %28 = vector.broadcast %25 : vector<16x1xf32> to vector<16x128xf32>
    %29 = arith.mulf %17, %28 : vector<16x128xf32>
    %30 = vector.broadcast %26 : vector<1x128xf32> to vector<16x128xf32>
    %31 = arith.mulf %29, %30 : vector<16x128xf32>
    %32 = vector.broadcast %27 : vector<1x128xf32> to vector<16x128xf32>
    %33 = arith.addf %31, %32 : vector<16x128xf32>
    %c0_11 = arith.constant 0 : index
    %c0_12 = arith.constant 0 : index
    %34 = vector.load %arg4[%c0_11, %c0_12] : memref<16x128xf32, #tpu.memory_space<vmem>>, vector<16x128xf32>
    tpu.vector_store %arg4[%c0_11, %c0_12], %33 {strides = array<i32>} : memref<16x128xf32, #tpu.memory_space<vmem>>, vector<16x128xf32>,
    return
  }
  func.func @transform_0(%arg0: i32) -> (i32, i32) {
    %c0_i32 = arith.constant 0 : i32
    %c0_i32_0 = arith.constant 0 : i32
    return %arg0, %c0_i32 : i32, i32
  }
  func.func @transform_1(%arg0: i32) -> (i32, i32) {
    %c0_i32 = arith.constant 0 : i32
    %c0_i32_0 = arith.constant 0 : i32
    %c0_i32_1 = arith.constant 0 : i32
    return %c0_i32, %c0_i32_0 : i32, i32
  }
  func.func @transform_2(%arg0: i32) -> (i32, i32) {
    %c0_i32 = arith.constant 0 : i32
    %c0_i32_0 = arith.constant 0 : i32
    %c0_i32_1 = arith.constant 0 : i32
    return %c0_i32, %c0_i32_0 : i32, i32
  }
  func.func @transform_3(%arg0: i32) -> (i32, i32) {
    %c0_i32 = arith.constant 0 : i32
    %c0_i32_0 = arith.constant 0 : i32
    return %arg0, %c0_i32 : i32, i32
  }
}

</mosaic_0001>

<llo_original>
// kernel: tpu_custom_call.1
$region0: #{tpu_custom_call.1}
  #allocation0 [shape = 'u32[]', space=smem, size = 0x4, offset = 0x4, fixed_abs, tag = 'smem constant byte address 0x4 - core index']
  #allocation1 [shape = 'u32[144,128]{1,0:T(1,128)}', space=vmem, size = 0x12000, scoped, tag = 'internal scratch']
  %s0 = inlined_call_operand.hbm [shape: f32[16,128], index: 0, kind: input, shape index: {}, may-alias: {0,3}]
  %s1 = inlined_call_operand.vmem [shape: f32[1,128], index: 1, kind: input, shape index: {}]
  %s2 = inlined_call_operand.vmem [shape: f32[1,128], index: 2, kind: input, shape index: {}]
  %s3 = inlined_call_operand.hbm [shape: f32[16,128], index: 3, kind: output, shape index: {}, may-alias: {0,3}]
  %s4 = sld [smem:[#allocation0]]
  $region26: #{tpu_custom_call.1} parent=0
    _
  %s6 = ssub.s32 1, %s4
  %s7 = scalar_select 0, %s6, %s4
  $region1: #{tpu_custom_call.1} parent=0
    #allocation2 [shape = 'u8[8192]{0}', space=vmem, size = 0x2000, scoped, tag = 'input window, operand 0, single buffered']
    #allocation3 [shape = 's32[1]{0}', space=sflag, size = 0x4, scoped, tag = 'scoped memory for tpu_custom_call.1']
    #allocation4 [shape = 's32[1]{0}', space=sflag, size = 0x4, scoped, tag = 'scoped memory for tpu_custom_call.1']
    #allocation5 [shape = 'u8[8192]{0}', space=vmem, size = 0x2000, scoped, tag = 'output window, operand 0, single buffered']
    %8 = vsyncpa [#allocation3], 0
    %9 = vsyncpa [#allocation4], 0
    // Predicated region
    $region2: #{tpu_custom_call.1} parent=1 // pred_check
      _
    $region3: #{tpu_custom_call.1} parent=1 // pred_check_branch
      %11 = sbr.rel (0) target = $region5
    $region4: #{tpu_custom_call.1} parent=1 // pred_region
      %s13 = ssub.s32 256, 256
      %14 = vsyncadd [#allocation3], %s13
      %s15 = sshll.u32 [#allocation2], 4
      %s16 = int_to_ptr.vmem [resolvable:$true] %s15
      %21 = dma.hbm_to_vmem [thread:$0]  %s0, 256, %s16, [#allocation3], 128, 128, 8
    $region5: #{tpu_custom_call.1} parent=1 // pred_fallthru
      _
    // Predicated region
    $region6: #{tpu_custom_call.1} parent=1 // pred_check
      _
    $region7: #{tpu_custom_call.1} parent=1 // pred_check_branch
      %23 = sbr.rel (0) target = $region9
    $region8: #{tpu_custom_call.1} parent=1 // pred_region
      _
    $region9: #{tpu_custom_call.1} parent=1 // pred_fallthru
      _
    // Predicated region
    $region10: #{tpu_custom_call.1} parent=1 // pred_check
      _
    $region11: #{tpu_custom_call.1} parent=1 // pred_check_branch
      %25 = sbr.rel (0) target = $region13
    $region12: #{tpu_custom_call.1} parent=1 // pred_region
      _
    $region13: #{tpu_custom_call.1} parent=1 // pred_fallthru
      _
    // Predicated region
    $region14: #{tpu_custom_call.1} parent=1 // pred_check
      _
    $region15: #{tpu_custom_call.1} parent=1 // pred_check_branch
      %27 = sbr.rel (0) target = $region17
    $region16: #{tpu_custom_call.1} parent=1 // pred_region
      %28 = dma.done [#allocation3], 256
    $region17: #{tpu_custom_call.1} parent=1 // pred_fallthru
      _
    %v29 = vld [vmem:[#allocation2] sm:$0xff]
    %v30 = vld [vmem:[#allocation2 + $0x8] sm:$0xff]
    %v31 = vlaneseq
    %v32 = vand.u32 %v31, 127
    %vm33 = vcmp.lt.s32.totalorder %v32, 32
    %v34 = vsel %vm33, 1, 0
    %vm35 = vcmp.eq.s32.totalorder %v34, 1
    %v36 = vsel %vm35, %v29, 0.0
    %v37 = vsel %vm35, %v30, 0.0
    %38 = vadd.xlane.f32.xlu0 %v36
    %v39 = vpop.xlane.xlu0 %38
    %40 = vadd.xlane.f32.xlu0 %v37
    %v41 = vpop.xlane.xlu0 %40
    %v42 = vmul.f32 %v39, 0.03125
    %v43 = vmul.f32 %v41, 0.03125
    %v44 = vsub.f32 %v36, %v42
    %v45 = vsub.f32 %v37, %v43
    %v46 = vsel %vm35, %v44, 0.0
    %v47 = vsel %vm35, %v45, 0.0
    %v48 = vmul.f32 %v46, %v46
    %v49 = vmul.f32 %v47, %v47
    %50 = vadd.xlane.f32.xlu0 %v48
    %v51 = vpop.xlane.xlu0 %50
    %52 = vadd.xlane.f32.xlu0 %v49
    %v53 = vpop.xlane.xlu0 %52
    %v54 = vmul.f32 %v51, 0.03125
    %v55 = vmul.f32 %v53, 0.03125
    %v56 = vadd.f32 %v54, 1e-05
    %v57 = vadd.f32 %v55, 1e-05
    %v58 = vrsqrt.pop %v56
    %v59 = vrsqrt.pop %v57
    %v60 = vld [vmem:[%s1] sm:$0x1]
    %v61 = vld [vmem:[%s2] sm:$0x1]
    %v62 = vmul.f32 %v46, %v58
    %v63 = vmul.f32 %v47, %v59
    %v65 = vlaneseq
    %v66 = vshrl.u32 %v65, 7
    %v67 = vsub.s32 0, %v66
    %v68 = vrot.slane %v60, %v67
    %v70 = vmul.f32 %v62, %v68
    %v71 = vmul.f32 %v63, %v68
    %v73 = vlaneseq
    %v74 = vshrl.u32 %v73, 7
    %v75 = vsub.s32 0, %v74
    %v76 = vrot.slane %v61, %v75
    %v78 = vadd.f32 %v70, %v76
    %v79 = vadd.f32 %v71, %v76
    %80 = vst [vmem:[#allocation5] sm:$0xff] %v78
    %81 = vst [vmem:[#allocation5 + $0x8] sm:$0xff] %v79
    // Predicated region
    $region18: #{tpu_custom_call.1} parent=1 // pred_check
      _
    $region19: #{tpu_custom_call.1} parent=1 // pred_check_branch
      %83 = sbr.rel (0) target = $region21
    $region20: #{tpu_custom_call.1} parent=1 // pred_region
      %s85 = ssub.s32 256, 256
      %86 = vsyncadd [#allocation4], %s85
      %s87 = sshll.u32 [#allocation5], 4
      %s88 = int_to_ptr.vmem [resolvable:$true] %s87
      %93 = dma.vmem_to_hbm [thread:$0]  %s88, 256, %s3, [#allocation4], 128, 128, 8
    $region21: #{tpu_custom_call.1} parent=1 // pred_fallthru
      _
    // Predicated region
    $region22: #{tpu_custom_call.1} parent=1 // pred_check
      _
    $region23: #{tpu_custom_call.1} parent=1 // pred_check_branch
      %95 = sbr.rel (0) target = $region25
    $region24: #{tpu_custom_call.1} parent=1 // pred_region
      %96 = dma.done [#allocation4], 256
    $region25: #{tpu_custom_call.1} parent=1 // pred_fallthru
      _
    %97 = vsyncpa [#allocation3], 1
    %98 = vsyncpa [#allocation4], 1

</llo_original>
